<compile_context>
chip_gen: v5e
topology: v5e:2x2
jax: 0.10.0
libtpu: 0.0.40
codegen_flags: <defaults>
</compile_context>

<pallas_src>
import jax
import jax.numpy as jnp
from jax.experimental import pallas as pl
from jax.experimental.pallas import tpu as pltpu


def nw_kernel(w_ref, q_ref, k_ref, v_ref, o_ref):
    # w_ref: SMEM (1,) learnable scalar parameter
    # q_ref: VMEM (1, tn)  queries, lane-dense
    # k_ref: VMEM (tn, M)  keys   (native dtype)
    # v_ref: VMEM (tn, M)  values (native dtype)
    # o_ref: VMEM (1, tn)  output, lane-dense
    w = w_ref[0].astype(jnp.float32)
    c = -0.5 * w * w                          # folded scalar constant

    # promote streamed tiles to f32 for compute (v5e has no bf16 VPU/EUP)
    q = jnp.transpose(q_ref[...].astype(jnp.float32))     # (tn, 1) small XLU transpose
    k = k_ref[...].astype(jnp.float32)                     # (tn, M)
    v = v_ref[...].astype(jnp.float32)                     # (tn, M)

    d = q - k                                  # lane-broadcast subtract
    scores = c * (d * d)                       # (tn, M): 2 muls per element

    # numerically stable softmax along the key axis (kept on lanes);
    # do NOT remove the max: scores can be arbitrarily negative for large w.
    mx = jnp.max(scores, axis=1, keepdims=True)            # XLU reduce
    e = jnp.exp(scores - mx)                                # EUP

    # deferred normalization: only the (tn,1) sums are normalized.
    num = jnp.sum(e * v, axis=1, keepdims=True)             # (tn, 1)
    den = jnp.sum(e, axis=1, keepdims=True)                 # (tn, 1)
    res = num / den        # exact divide (approx reciprocal was too lossy)

    # lane-dense store: (tn,1) -> (1,tn) via one small XLU transpose
    o_ref[...] = jnp.transpose(res).astype(o_ref.dtype)


def _pick_tile_n(n, m, itemsize, budget_bytes=20 * 1024 * 1024):
    """Largest 128-multiple row tile whose double-buffered K/V working set
    stays under `budget_bytes` (fits v7x's smaller VMEM with headroom)."""
    m_pad = ((m + 127) // 128) * 128
    per_row = 2 * 2 * m_pad * itemsize          # (K + V) x 2 pipeline buffers
    t = (budget_bytes // per_row) // 128 * 128
    t = int(max(128, min(t, 2048)))
    if t < n:
        return t
    if n <= 128:
        return n                                 # one block; block dims == array dims
    # v7x has 2 TensorCores per chip: keep >= 2 grid steps so the "parallel"
    # N axis can be sharded across both cores.
    half = -(-n // 2)
    return ((half + 127) // 128) * 128


def nw_kernel_regression(queries, keys, values, w, *, tile_n=None):
    """queries: (N,), keys/values: (N, M), w: (1,) -> (N,) float32."""
    n, m = keys.shape
    if tile_n is None:
        tile_n = _pick_tile_n(n, m, jnp.dtype(keys.dtype).itemsize)
    else:
        tile_n = int(tile_n)
        if tile_n >= n:
            tile_n = n                           # single block == full dims
        else:
            tile_n = max(128, (tile_n // 128) * 128)   # lane-dense blocks need 128-multiples

    # Native-dtype streaming: no wrapper-side casts of q/k/v.
    q2 = queries.reshape(1, n)                   # lane-dense queries, no copy
    w1 = jnp.asarray(w, dtype=jnp.float32).reshape(1)

    out = pl.pallas_call(
        nw_kernel,
        out_shape=jax.ShapeDtypeStruct((1, n), jnp.float32),
        grid=(pl.cdiv(n, tile_n),),
        in_specs=[
            pl.BlockSpec(memory_space=pltpu.MemorySpace.SMEM),   # w (scalar)
            pl.BlockSpec((1, tile_n), lambda i: (0, i)),         # queries (lane-dense)
            pl.BlockSpec((tile_n, m), lambda i: (i, 0)),         # keys
            pl.BlockSpec((tile_n, m), lambda i: (i, 0)),         # values
        ],
        out_specs=pl.BlockSpec((1, tile_n), lambda i: (0, i)),   # output (lane-dense)
        compiler_params=pltpu.CompilerParams(
            dimension_semantics=("parallel",),
            vmem_limit_bytes=32 * 1024 * 1024,   # raise v5e's 16 MiB scoped default
        ),
    )(w1, q2, keys, values)
    return out.reshape(-1)


def f(x):
    return 2.0 * jnp.sin(x) + x ** 0.8


def _reference(queries, keys, values, w):
    q_rep = jnp.repeat(queries, keys.shape[1]).reshape(-1, keys.shape[1])
    attn = jax.nn.softmax(-0.5 * ((q_rep - keys) * w[0]) ** 2, axis=1)
    return jnp.sum(attn * values, axis=1)


if __name__ == "__main__":
    key = jax.random.PRNGKey(0)
    k_x, k_noise, k_w, k_big = jax.random.split(key, 4)

    # ---- case 1: the exact shapes from the PyTorch script (N=50, M=49) ----
    n_train = 50
    x_train = jnp.sort(jax.random.uniform(k_x, (n_train,)) * 5.0)
    y_train = f(x_train) + 0.5 * jax.random.normal(k_noise, (n_train,))

    eye = jnp.eye(n_train, dtype=bool)
    X_tile = jnp.tile(x_train, (n_train, 1))             # (50, 50)
    Y_tile = jnp.tile(y_train, (n_train, 1))             # (50, 50)
    keys = X_tile[~eye].reshape(n_train, n_train - 1)    # (50, 49)
    values = Y_tile[~eye].reshape(n_train, n_train - 1)  # (50, 49)
    queries = x_train                                    # (50,)

    w = jax.random.uniform(k_w, (1,), dtype=jnp.float32)  # torch.rand((1,))

    out = jax.block_until_ready(nw_kernel_regression(queries, keys, values, w))
    ref = _reference(queries, keys, values, w)
    assert out.shape == (n_train,)
    assert jnp.allclose(out, ref, atol=1e-3, rtol=1e-3), (out, ref)

    # ---- case 2: multi-block pipelined path (N=256 -> two 128-row tiles) ---
    kb1, kb2, kb3, kb4 = jax.random.split(k_big, 4)
    nb, mb = 256, 96
    q_big = jax.random.uniform(kb1, (nb,)) * 5.0
    k_big_arr = jax.random.uniform(kb2, (nb, mb)) * 5.0
    v_big_arr = jax.random.normal(kb3, (nb, mb))

    out_big = jax.block_until_ready(
        nw_kernel_regression(q_big, k_big_arr, v_big_arr, w))
    ref_big = _reference(q_big, k_big_arr, v_big_arr, w)
    assert out_big.shape == (nb,)
    assert jnp.allclose(out_big, ref_big, atol=1e-3, rtol=1e-3), (out_big, ref_big)

    # ---- case 3: N not a multiple of the tile + bf16 native-dtype streaming
    nc, mc = 200, 49
    kc1, kc2, kc3 = jax.random.split(kb4, 3)
    q_c = (jax.random.uniform(kc1, (nc,)) * 5.0).astype(jnp.bfloat16)
    k_c = (jax.random.uniform(kc2, (nc, mc)) * 5.0).astype(jnp.bfloat16)
    v_c = jax.random.normal(kc3, (nc, mc)).astype(jnp.bfloat16)

    out_c = jax.block_until_ready(nw_kernel_regression(q_c, k_c, v_c, w))
    # reference on the identical (bf16-rounded) data, promoted to f32 like the kernel
    ref_c = _reference(q_c.astype(jnp.float32), k_c.astype(jnp.float32),
                       v_c.astype(jnp.float32), w)
    assert out_c.shape == (nc,)
    assert jnp.allclose(out_c, ref_c, atol=2e-3, rtol=2e-3), (out_c, ref_c)

    print("KERNEL_OK")
</pallas_src>

<mosaic_0001>
module attributes {stable_mosaic.version = 11 : i64} {
  func.func @nw_kernel(%arg0: i32, %arg1: memref<1xf32, #tpu.memory_space<smem>>, %arg2: memref<1x50xf32, #tpu.memory_space<vmem>>, %arg3: memref<50x49xf32, #tpu.memory_space<vmem>>, %arg4: memref<50x49xf32, #tpu.memory_space<vmem>>, %arg5: memref<1x50xf32, #tpu.memory_space<vmem>>) attributes {dimension_semantics = [#tpu.dimension_semantics<parallel>], iteration_bounds = array<i64: 1>, scalar_prefetch = 0 : i64, scratch_operands = 0 : i64, tpu.core_type = #tpu.core_type<tc>, window_params = [{transform_indices = @transform_0, window_bounds = array<i64: 1>}, {transform_indices = @transform_1, window_bounds = array<i64: 1, 50>}, {transform_indices = @transform_2, window_bounds = array<i64: 50, 49>}, {transform_indices = @transform_3, window_bounds = array<i64: 50, 49>}, {transform_indices = @transform_4, window_bounds = array<i64: 1, 50>}]} {
    %c0 = arith.constant 0 : index
    %0 = memref.load %arg1[%c0] : memref<1xf32, #tpu.memory_space<smem>>
    %cst = arith.constant -5.000000e-01 : f32
    %1 = arith.mulf %cst, %0 : f32
    %2 = arith.mulf %1, %0 : f32
    %c0_0 = arith.constant 0 : index
    %c0_1 = arith.constant 0 : index
    %3 = vector.load %arg2[%c0_0, %c0_1] : memref<1x50xf32, #tpu.memory_space<vmem>>, vector<1x50xf32>
    %4 = tpu.transpose %3, [1, 0] : vector<1x50xf32> -> vector<50x1xf32>
    %c0_2 = arith.constant 0 : index
    %c0_3 = arith.constant 0 : index
    %5 = vector.load %arg3[%c0_2, %c0_3] : memref<50x49xf32, #tpu.memory_space<vmem>>, vector<50x49xf32>
    %c0_4 = arith.constant 0 : index
    %c0_5 = arith.constant 0 : index
    %6 = vector.load %arg4[%c0_4, %c0_5] : memref<50x49xf32, #tpu.memory_space<vmem>>, vector<50x49xf32>
    %7 = vector.broadcast %4 : vector<50x1xf32> to vector<50x49xf32>
    %8 = arith.subf %7, %5 : vector<50x49xf32>
    %9 = arith.mulf %8, %8 : vector<50x49xf32>
    %10 = vector.broadcast %2 : f32 to vector<50x49xf32>
    %11 = arith.mulf %10, %9 : vector<50x49xf32>
    %cst_6 = arith.constant dense<0xFF800000> : vector<50xf32>
    %12 = vector.multi_reduction <maximumf>, %11, %cst_6 [1] : vector<50x49xf32> to vector<50xf32>
    %13 = vector.shape_cast %12 : vector<50xf32> to vector<50x1xf32>
    %14 = vector.broadcast %13 : vector<50x1xf32> to vector<50x49xf32>
    %15 = arith.subf %11, %14 : vector<50x49xf32>
    %16 = math.exp %15 : vector<50x49xf32>
    %17 = arith.mulf %16, %6 : vector<50x49xf32>
    %cst_7 = arith.constant dense<0.000000e+00> : vector<50xf32>
    %18 = vector.multi_reduction <add>, %17, %cst_7 [1] : vector<50x49xf32> to vector<50xf32>
    %19 = vector.shape_cast %18 : vector<50xf32> to vector<50x1xf32>
    %cst_8 = arith.constant dense<0.000000e+00> : vector<50xf32>
    %20 = vector.multi_reduction <add>, %16, %cst_8 [1] : vector<50x49xf32> to vector<50xf32>
    %21 = vector.shape_cast %20 : vector<50xf32> to vector<50x1xf32>
    %22 = arith.divf %19, %21 : vector<50x1xf32>
    %23 = tpu.transpose %22, [1, 0] : vector<50x1xf32> -> vector<1x50xf32>
    %c0_9 = arith.constant 0 : index
    %c0_10 = arith.constant 0 : index
    %24 = vector.load %arg5[%c0_9, %c0_10] : memref<1x50xf32, #tpu.memory_space<vmem>>, vector<1x50xf32>
    tpu.vector_store %arg5[%c0_9, %c0_10], %23 {strides = array<i32>} : memref<1x50xf32, #tpu.memory_space<vmem>>, vector<1x50xf32>,
    return
  }
  func.func @transform_0(%arg0: i32) -> i32 {
    %c0_i32 = arith.constant 0 : i32
    %c0_i32_0 = arith.constant 0 : i32
    return %c0_i32 : i32
  }
  func.func @transform_1(%arg0: i32) -> (i32, i32) {
    %c0_i32 = arith.constant 0 : i32
    %c0_i32_0 = arith.constant 0 : i32
    return %c0_i32, %arg0 : i32, i32
  }
  func.func @transform_2(%arg0: i32) -> (i32, i32) {
    %c0_i32 = arith.constant 0 : i32
    %c0_i32_0 = arith.constant 0 : i32
    return %arg0, %c0_i32 : i32, i32
  }
  func.func @transform_3(%arg0: i32) -> (i32, i32) {
    %c0_i32 = arith.constant 0 : i32
    %c0_i32_0 = arith.constant 0 : i32
    return %arg0, %c0_i32 : i32, i32
  }
  func.func @transform_4(%arg0: i32) -> (i32, i32) {
    %c0_i32 = arith.constant 0 : i32
    %c0_i32_0 = arith.constant 0 : i32
    return %c0_i32, %arg0 : i32, i32
  }
}

</mosaic_0001>

<llo_original>
// kernel: tpu_custom_call.1
$region0: #{tpu_custom_call.1}
  #allocation0 [shape = 'u32[]', space=smem, size = 0x4, offset = 0x4, fixed_abs, tag = 'smem constant byte address 0x4 - core index']
  #allocation1 [shape = 'u32[72,128]{1,0:T(1,128)}', space=vmem, size = 0x9000, scoped, tag = 'internal scratch']
  #allocation2 [shape = 'f32[1]{0:T(128)S(6)}', space=smem, size = 0x200, scoped, tag = 'scoped memory for tpu_custom_call.1']
  %s0 = inlined_call_operand.<no memory space> [shape: f32[1], index: 0, kind: input, shape index: {}]
  %s1 = inlined_call_operand.vmem [shape: f32[1,50], index: 1, kind: input, shape index: {}]
  %s2 = inlined_call_operand.hbm [shape: f32[50,49], index: 2, kind: input, shape index: {}]
  %s3 = inlined_call_operand.hbm [shape: f32[50,49], index: 3, kind: input, shape index: {}]
  %s4 = inlined_call_operand.hbm [shape: f32[1,50], index: 4, kind: output, shape index: {}]
  %s5 = sld [smem:[#allocation0]]
  $region34: #{tpu_custom_call.1} parent=0
    _
  %s7 = ssub.s32 1, %s5
  %s8 = scalar_select 0, %s7, %s5
  %9 = sst [smem:[#allocation2]] %s0
  $region1: #{tpu_custom_call.1} parent=0
    #allocation3 [shape = 'u8[28672]{0}', space=vmem, size = 0x7000, scoped, tag = 'input window, operand 2, single buffered']
    #allocation4 [shape = 's32[1]{0}', space=sflag, size = 0x4, scoped, tag = 'scoped memory for tpu_custom_call.1']
    #allocation5 [shape = 's32[1]{0}', space=sflag, size = 0x4, scoped, tag = 'scoped memory for tpu_custom_call.1']
    #allocation6 [shape = 'u8[28672]{0}', space=vmem, size = 0x7000, scoped, tag = 'input window, operand 3, single buffered']
    #allocation7 [shape = 's32[1]{0}', space=sflag, size = 0x4, scoped, tag = 'scoped memory for tpu_custom_call.1']
    #allocation8 [shape = 'u8[512]{0}', space=vmem, size = 0x400, scoped, tag = 'output window, operand 0, single buffered']
    %10 = vsyncpa [#allocation4], 0
    %11 = vsyncpa [#allocation7], 0
    %12 = vsyncpa [#allocation5], 0
    // Predicated region
    $region2: #{tpu_custom_call.1} parent=1 // pred_check
      _
    $region3: #{tpu_custom_call.1} parent=1 // pred_check_branch
      %14 = sbr.rel (0) target = $region5
    $region4: #{tpu_custom_call.1} parent=1 // pred_region
      _
    $region5: #{tpu_custom_call.1} parent=1 // pred_fallthru
      _
    // Predicated region
    $region6: #{tpu_custom_call.1} parent=1 // pred_check
      _
    $region7: #{tpu_custom_call.1} parent=1 // pred_check_branch
      %16 = sbr.rel (0) target = $region9
    $region8: #{tpu_custom_call.1} parent=1 // pred_region
      _
    $region9: #{tpu_custom_call.1} parent=1 // pred_fallthru
      _
    // Predicated region
    $region10: #{tpu_custom_call.1} parent=1 // pred_check
      _
    $region11: #{tpu_custom_call.1} parent=1 // pred_check_branch
      %18 = sbr.rel (0) target = $region13
    $region12: #{tpu_custom_call.1} parent=1 // pred_region
      %20 = vsyncadd [#allocation4], 0
      %s21 = sshll.u32 %s2, 4
      %s22 = int_to_ptr.hbm [resolvable:$true] %s21
      %s23 = sshll.u32 [#allocation3], 4
      %s24 = int_to_ptr.vmem [resolvable:$true] %s23
      %29 = dma.hbm_to_vmem [thread:$0]  %s22, 896, %s24, [#allocation4], 128, 128, 8
    $region13: #{tpu_custom_call.1} parent=1 // pred_fallthru
      _
    // Predicated region
    $region14: #{tpu_custom_call.1} parent=1 // pred_check
      _
    $region15: #{tpu_custom_call.1} parent=1 // pred_check_branch
      %31 = sbr.rel (0) target = $region17
    $region16: #{tpu_custom_call.1} parent=1 // pred_region
      %33 = vsyncadd [#allocation7], 0
      %s34 = sshll.u32 %s3, 4
      %s35 = int_to_ptr.hbm [resolvable:$true] %s34
      %s36 = sshll.u32 [#allocation6], 4
      %s37 = int_to_ptr.vmem [resolvable:$true] %s36
      %42 = dma.hbm_to_vmem [thread:$0]  %s35, 896, %s37, [#allocation7], 128, 128, 8
    $region17: #{tpu_custom_call.1} parent=1 // pred_fallthru
      _
    // Predicated region
    $region18: #{tpu_custom_call.1} parent=1 // pred_check
      _
    $region19: #{tpu_custom_call.1} parent=1 // pred_check_branch
      %44 = sbr.rel (0) target = $region21
    $region20: #{tpu_custom_call.1} parent=1 // pred_region
      %46 = dma.done [#allocation4], 896
    $region21: #{tpu_custom_call.1} parent=1 // pred_fallthru
      _
    // Predicated region
    $region22: #{tpu_custom_call.1} parent=1 // pred_check
      _
    $region23: #{tpu_custom_call.1} parent=1 // pred_check_branch
      %48 = sbr.rel (0) target = $region25
    $region24: #{tpu_custom_call.1} parent=1 // pred_region
      %50 = dma.done [#allocation7], 896
    $region25: #{tpu_custom_call.1} parent=1 // pred_fallthru
      _
    %s51 = sld [smem:[#allocation2]]
    %s52 = smul.f32 %s51, -0.5
    %s53 = smul.f32 %s52, %s51
    %v54 = vld [vmem:[%s1] sm:$0x1]
    %55 = vxpose.xlu0.b32.start [1/16] %v54, 128
    %56 = vxpose.xlu0.b32.cont [2/16] 0.0, 128
    %57 = vxpose.xlu0.b32.cont [3/16] 0.0, 128
    %58 = vxpose.xlu0.b32.cont [4/16] 0.0, 128
    %59 = vxpose.xlu0.b32.cont [5/16] 0.0, 128
    %60 = vxpose.xlu0.b32.cont [6/16] 0.0, 128
    %61 = vxpose.xlu0.b32.cont [7/16] 0.0, 128
    %62 = vxpose.xlu0.b32.cont [8/16] 0.0, 128
    %63 = vxpose.xlu0.b32.cont [9/16] 0.0, 128
    %64 = vxpose.xlu0.b32.cont [10/16] 0.0, 128
    %65 = vxpose.xlu0.b32.cont [11/16] 0.0, 128
    %66 = vxpose.xlu0.b32.cont [12/16] 0.0, 128
    %67 = vxpose.xlu0.b32.cont [13/16] 0.0, 128
    %68 = vxpose.xlu0.b32.cont [14/16] 0.0, 128
    %69 = vxpose.xlu0.b32.cont [15/16] 0.0, 128
    %70 = vxpose.xlu0.b32.end [16/16] 0.0, 128
    %v71 = vpop.trf.xlu0
    %v72 = vpop.trf.xlu0
    %v73 = vpop.trf.xlu0
    %v74 = vpop.trf.xlu0
    %v75 = vpop.trf.xlu0
    %v76 = vpop.trf.xlu0
    %v77 = vpop.trf.xlu0
    %v78 = vpop.trf.xlu0
    %v79 = vpop.trf.xlu0
    %v80 = vpop.trf.xlu0
    %v81 = vpop.trf.xlu0
    %v82 = vpop.trf.xlu0
    %v83 = vpop.trf.xlu0
    %v84 = vpop.trf.xlu0
    %v85 = vpop.trf.xlu0
    %v86 = vpop.trf.xlu0
    %v87 = vld [vmem:[#allocation3] sm:$0xff]
    %v88 = vld [vmem:[#allocation3 + $0x8] sm:$0xff]
    %v89 = vld [vmem:[#allocation3 + $0x10] sm:$0xff]
    %v90 = vld [vmem:[#allocation3 + $0x18] sm:$0xff]
    %v91 = vld [vmem:[#allocation3 + $0x20] sm:$0xff]
    %v92 = vld [vmem:[#allocation3 + $0x28] sm:$0xff]
    %v93 = vld [vmem:[#allocation3 + $0x30] sm:$0x3]
    %v94 = vld [vmem:[#allocation6] sm:$0xff]
    %v95 = vld [vmem:[#allocation6 + $0x8] sm:$0xff]
    %v96 = vld [vmem:[#allocation6 + $0x10] sm:$0xff]
    %v97 = vld [vmem:[#allocation6 + $0x18] sm:$0xff]
    %v98 = vld [vmem:[#allocation6 + $0x20] sm:$0xff]
    %v99 = vld [vmem:[#allocation6 + $0x28] sm:$0xff]
    %v100 = vld [vmem:[#allocation6 + $0x30] sm:$0x3]
    %102 = vset.pattern.permute.xlu0 0
    %103 = vperm.xlu0 %102, %v71
    %v104 = vpop.permute.xlu0 %103
    %107 = vset.pattern.permute.xlu0 0
    %108 = vperm.xlu0 %107, %v72
    %v109 = vpop.permute.xlu0 %108
    %112 = vset.pattern.permute.xlu0 0
    %113 = vperm.xlu0 %112, %v73
    %v114 = vpop.permute.xlu0 %113
    %117 = vset.pattern.permute.xlu0 0
    %118 = vperm.xlu0 %117, %v74
    %v119 = vpop.permute.xlu0 %118
    %122 = vset.pattern.permute.xlu0 0
    %123 = vperm.xlu0 %122, %v75
    %v124 = vpop.permute.xlu0 %123
    %127 = vset.pattern.permute.xlu0 0
    %128 = vperm.xlu0 %127, %v76
    %v129 = vpop.permute.xlu0 %128
    %132 = vset.pattern.permute.xlu0 0
    %133 = vperm.xlu0 %132, %v77
    %v134 = vpop.permute.xlu0 %133
    %v136 = vsub.f32 %v104, %v87
    %v137 = vsub.f32 %v109, %v88
    %v138 = vsub.f32 %v114, %v89
    %v139 = vsub.f32 %v119, %v90
    %v140 = vsub.f32 %v124, %v91
    %v141 = vsub.f32 %v129, %v92
    %v142 = vsub.f32 %v134, %v93
    %v143 = vmul.f32 %v136, %v136
    %v144 = vmul.f32 %v137, %v137
    %v145 = vmul.f32 %v138, %v138
    %v146 = vmul.f32 %v139, %v139
    %v147 = vmul.f32 %v140, %v140
    %v148 = vmul.f32 %v141, %v141
    %v149 = vmul.f32 %v142, %v142
    %v150 = vstv %s53
    %v151 = vmul.f32 %v150, %v143
    %v152 = vmul.f32 %v150, %v144
    %v153 = vmul.f32 %v150, %v145
    %v154 = vmul.f32 %v150, %v146
    %v155 = vmul.f32 %v150, %v147
    %v156 = vmul.f32 %v150, %v148
    %v157 = vmul.f32 %v150, %v149
    %vm158 = vcmask 400384
    %v159 = vsel %vm158, %v151, -inf
    %160 = vmax.xlane.f32.xlu0 %v159
    %v161 = vpop.xlane.xlu0 %160
    %v162 = vsel %vm158, %v152, -inf
    %163 = vmax.xlane.f32.xlu0 %v162
    %v164 = vpop.xlane.xlu0 %163
    %v165 = vsel %vm158, %v153, -inf
    %166 = vmax.xlane.f32.xlu0 %v165
    %v167 = vpop.xlane.xlu0 %166
    %v168 = vsel %vm158, %v154, -inf
    %169 = vmax.xlane.f32.xlu0 %v168
    %v170 = vpop.xlane.xlu0 %169
    %v171 = vsel %vm158, %v155, -inf
    %172 = vmax.xlane.f32.xlu0 %v171
    %v173 = vpop.xlane.xlu0 %172
    %v174 = vsel %vm158, %v156, -inf
    %175 = vmax.xlane.f32.xlu0 %v174
    %v176 = vpop.xlane.xlu0 %175
    %vm177 = vcmask 394240
    %v178 = vsel %vm177, %v157, -inf
    %179 = vmax.xlane.f32.xlu0 %v178
    %v180 = vpop.xlane.xlu0 %179
    %v181 = vsub.f32 %v151, %v161
    %v182 = vsub.f32 %v152, %v164
    %v183 = vsub.f32 %v153, %v167
    %v184 = vsub.f32 %v154, %v170
    %v185 = vsub.f32 %v155, %v173
    %v186 = vsub.f32 %v156, %v176
    %v187 = vsub.f32 %v157, %v180
    %v188 = vmul.f32 %v181, 1.442695
    %v189 = vpow.pop %v188
    %v190 = vmul.f32 %v182, 1.442695
    %v191 = vpow.pop %v190
    %v192 = vmul.f32 %v183, 1.442695
    %v193 = vpow.pop %v192
    %v194 = vmul.f32 %v184, 1.442695
    %v195 = vpow.pop %v194
    %v196 = vmul.f32 %v185, 1.442695
    %v197 = vpow.pop %v196
    %v198 = vmul.f32 %v186, 1.442695
    %v199 = vpow.pop %v198
    %v200 = vmul.f32 %v187, 1.442695
    %v201 = vpow.pop %v200
    %v202 = vmul.f32 %v189, %v94
    %v203 = vmul.f32 %v191, %v95
    %v204 = vmul.f32 %v193, %v96
    %v205 = vmul.f32 %v195, %v97
    %v206 = vmul.f32 %v197, %v98
    %v207 = vmul.f32 %v199, %v99
    %v208 = vmul.f32 %v201, %v100
    %v209 = vsel %vm158, %v202, 0.0
    %210 = vadd.xlane.f32.xlu0 %v209
    %v211 = vpop.xlane.xlu0 %210
    %v212 = vsel %vm158, %v203, 0.0
    %213 = vadd.xlane.f32.xlu0 %v212
    %v214 = vpop.xlane.xlu0 %213
    %v215 = vsel %vm158, %v204, 0.0
    %216 = vadd.xlane.f32.xlu0 %v215
    %v217 = vpop.xlane.xlu0 %216
    %v218 = vsel %vm158, %v205, 0.0
    %219 = vadd.xlane.f32.xlu0 %v218
    %v220 = vpop.xlane.xlu0 %219
    %v221 = vsel %vm158, %v206, 0.0
    %222 = vadd.xlane.f32.xlu0 %v221
    %v223 = vpop.xlane.xlu0 %222
    %v224 = vsel %vm158, %v207, 0.0
    %225 = vadd.xlane.f32.xlu0 %v224
    %v226 = vpop.xlane.xlu0 %225
    %v227 = vsel %vm177, %v208, 0.0
    %228 = vadd.xlane.f32.xlu0 %v227
    %v229 = vpop.xlane.xlu0 %228
    %v230 = vsel %vm158, %v189, 0.0
    %231 = vadd.xlane.f32.xlu0 %v230
    %v232 = vpop.xlane.xlu0 %231
    %v233 = vsel %vm158, %v191, 0.0
    %234 = vadd.xlane.f32.xlu0 %v233
    %v235 = vpop.xlane.xlu0 %234
    %v236 = vsel %vm158, %v193, 0.0
    %237 = vadd.xlane.f32.xlu0 %v236
    %v238 = vpop.xlane.xlu0 %237
    %v239 = vsel %vm158, %v195, 0.0
    %240 = vadd.xlane.f32.xlu0 %v239
    %v241 = vpop.xlane.xlu0 %240
    %v242 = vsel %vm158, %v197, 0.0
    %243 = vadd.xlane.f32.xlu0 %v242
    %v244 = vpop.xlane.xlu0 %243
    %v245 = vsel %vm158, %v199, 0.0
    %246 = vadd.xlane.f32.xlu0 %v245
    %v247 = vpop.xlane.xlu0 %246
    %v248 = vsel %vm177, %v201, 0.0
    %249 = vadd.xlane.f32.xlu0 %v248
    %v250 = vpop.xlane.xlu0 %249
    %v251 = vrcp.pop %v232
    %v252 = vmul.f32 %v232, %v251
    %v253 = vsub.f32 1.0, %v252
    %v254 = vmul.f32 %v251, %v253
    %v255 = vadd.f32 %v251, %v254
    %vm256 = vweird.f32 %v232
    %vm257 = vweird.f32 %v251
    %vm258 = vmor %vm256, %vm257
    %v259 = vsel %vm258, %v251, %v255
    %v260 = vand.u32 2147483647, %v232
    %vm261 = vcmp.eq.f32.partialorder %v260, 8.507059e+37
    %v262 = vand.u32 %v232, 2147483648
    %v263 = vor.u32 1.1754944e-38, %v262
    %v264 = vsel %vm261, %v263, %v259
    %v265 = vmul.f32 %v211, %v264
    %v266 = vrcp.pop %v235
    %v267 = vmul.f32 %v235, %v266
    %v268 = vsub.f32 1.0, %v267
    %v269 = vmul.f32 %v266, %v268
    %v270 = vadd.f32 %v266, %v269
    %vm271 = vweird.f32 %v235
    %vm272 = vweird.f32 %v266
    %vm273 = vmor %vm271, %vm272
    %v274 = vsel %vm273, %v266, %v270
    %v275 = vand.u32 2147483647, %v235
    %vm276 = vcmp.eq.f32.partialorder %v275, 8.507059e+37
    %v277 = vand.u32 %v235, 2147483648
    %v278 = vor.u32 1.1754944e-38, %v277
    %v279 = vsel %vm276, %v278, %v274
    %v280 = vmul.f32 %v214, %v279
    %v281 = vrcp.pop %v238
    %v282 = vmul.f32 %v238, %v281
    %v283 = vsub.f32 1.0, %v282
    %v284 = vmul.f32 %v281, %v283
    %v285 = vadd.f32 %v281, %v284
    %vm286 = vweird.f32 %v238
    %vm287 = vweird.f32 %v281
    %vm288 = vmor %vm286, %vm287
    %v289 = vsel %vm288, %v281, %v285
    %v290 = vand.u32 2147483647, %v238
    %vm291 = vcmp.eq.f32.partialorder %v290, 8.507059e+37
    %v292 = vand.u32 %v238, 2147483648
    %v293 = vor.u32 1.1754944e-38, %v292
    %v294 = vsel %vm291, %v293, %v289
    %v295 = vmul.f32 %v217, %v294
    %v296 = vrcp.pop %v241
    %v297 = vmul.f32 %v241, %v296
    %v298 = vsub.f32 1.0, %v297
    %v299 = vmul.f32 %v296, %v298
    %v300 = vadd.f32 %v296, %v299
    %vm301 = vweird.f32 %v241
    %vm302 = vweird.f32 %v296
    %vm303 = vmor %vm301, %vm302
    %v304 = vsel %vm303, %v296, %v300
    %v305 = vand.u32 2147483647, %v241
    %vm306 = vcmp.eq.f32.partialorder %v305, 8.507059e+37
    %v307 = vand.u32 %v241, 2147483648
    %v308 = vor.u32 1.1754944e-38, %v307
    %v309 = vsel %vm306, %v308, %v304
    %v310 = vmul.f32 %v220, %v309
    %v311 = vrcp.pop %v244
    %v312 = vmul.f32 %v244, %v311
    %v313 = vsub.f32 1.0, %v312
    %v314 = vmul.f32 %v311, %v313
    %v315 = vadd.f32 %v311, %v314
    %vm316 = vweird.f32 %v244
    %vm317 = vweird.f32 %v311
    %vm318 = vmor %vm316, %vm317
    %v319 = vsel %vm318, %v311, %v315
    %v320 = vand.u32 2147483647, %v244
    %vm321 = vcmp.eq.f32.partialorder %v320, 8.507059e+37
    %v322 = vand.u32 %v244, 2147483648
    %v323 = vor.u32 1.1754944e-38, %v322
    %v324 = vsel %vm321, %v323, %v319
    %v325 = vmul.f32 %v223, %v324
    %v326 = vrcp.pop %v247
    %v327 = vmul.f32 %v247, %v326
    %v328 = vsub.f32 1.0, %v327
    %v329 = vmul.f32 %v326, %v328
    %v330 = vadd.f32 %v326, %v329
    %vm331 = vweird.f32 %v247
    %vm332 = vweird.f32 %v326
    %vm333 = vmor %vm331, %vm332
    %v334 = vsel %vm333, %v326, %v330
    %v335 = vand.u32 2147483647, %v247
    %vm336 = vcmp.eq.f32.partialorder %v335, 8.507059e+37
    %v337 = vand.u32 %v247, 2147483648
    %v338 = vor.u32 1.1754944e-38, %v337
    %v339 = vsel %vm336, %v338, %v334
    %v340 = vmul.f32 %v226, %v339
    %v341 = vrcp.pop %v250
    %v342 = vmul.f32 %v250, %v341
    %v343 = vsub.f32 1.0, %v342
    %v344 = vmul.f32 %v341, %v343
    %v345 = vadd.f32 %v341, %v344
    %vm346 = vweird.f32 %v250
    %vm347 = vweird.f32 %v341
    %vm348 = vmor %vm346, %vm347
    %v349 = vsel %vm348, %v341, %v345
    %v350 = vand.u32 2147483647, %v250
    %vm351 = vcmp.eq.f32.partialorder %v350, 8.507059e+37
    %v352 = vand.u32 %v250, 2147483648
    %v353 = vor.u32 1.1754944e-38, %v352
    %v354 = vsel %vm351, %v353, %v349
    %v355 = vmul.f32 %v229, %v354
    %356 = vxpose.xlu0.b32.start [1/16] %v265, 128
    %357 = vxpose.xlu0.b32.cont [2/16] %v280, 128
    %358 = vxpose.xlu0.b32.cont [3/16] %v295, 128
    %359 = vxpose.xlu0.b32.cont [4/16] %v310, 128
    %360 = vxpose.xlu0.b32.cont [5/16] %v325, 128
    %361 = vxpose.xlu0.b32.cont [6/16] %v340, 128
    %362 = vxpose.xlu0.b32.cont [7/16] %v355, 128
    %363 = vxpose.xlu0.b32.cont [8/16] 0.0, 128
    %364 = vxpose.xlu0.b32.cont [9/16] 0.0, 128
    %365 = vxpose.xlu0.b32.cont [10/16] 0.0, 128
    %366 = vxpose.xlu0.b32.cont [11/16] 0.0, 128
    %367 = vxpose.xlu0.b32.cont [12/16] 0.0, 128
    %368 = vxpose.xlu0.b32.cont [13/16] 0.0, 128
    %369 = vxpose.xlu0.b32.cont [14/16] 0.0, 128
    %370 = vxpose.xlu0.b32.cont [15/16] 0.0, 128
    %371 = vxpose.xlu0.b32.end [16/16] 0.0, 128
    %v372 = vpop.trf.xlu0
    %v373 = vpop.trf.xlu0
    %v374 = vpop.trf.xlu0
    %v375 = vpop.trf.xlu0
    %v376 = vpop.trf.xlu0
    %v377 = vpop.trf.xlu0
    %v378 = vpop.trf.xlu0
    %v379 = vpop.trf.xlu0
    %v380 = vpop.trf.xlu0
    %v381 = vpop.trf.xlu0
    %v382 = vpop.trf.xlu0
    %v383 = vpop.trf.xlu0
    %v384 = vpop.trf.xlu0
    %v385 = vpop.trf.xlu0
    %v386 = vpop.trf.xlu0
    %v387 = vpop.trf.xlu0
    %vm388 = vcmask 401408
    %389 = vst.msk [vmem:[#allocation8] sm:$0x1] %vm388, %v372
    // Predicated region
    $region26: #{tpu_custom_call.1} parent=1 // pred_check
      _
    $region27: #{tpu_custom_call.1} parent=1 // pred_check_branch
      %391 = sbr.rel (0) target = $region29
    $region28: #{tpu_custom_call.1} parent=1 // pred_region
      %393 = vsyncadd [#allocation5], 0
      %s395 = sshll.u32 [#allocation8], 4
      %s396 = int_to_ptr.vmem [resolvable:$true] %s395
      %s397 = sshll.u32 %s4, 4
      %s398 = int_to_ptr.hbm [resolvable:$true] %s397
      %400 = dma.vmem_to_hbm [thread:$0]  %s396, 16, %s398, [#allocation5]
    $region29: #{tpu_custom_call.1} parent=1 // pred_fallthru
      _
    // Predicated region
    $region30: #{tpu_custom_call.1} parent=1 // pred_check
      _
    $region31: #{tpu_custom_call.1} parent=1 // pred_check_branch
      %402 = sbr.rel (0) target = $region33
    $region32: #{tpu_custom_call.1} parent=1 // pred_region
      %404 = dma.done [#allocation5], 16
    $region33: #{tpu_custom_call.1} parent=1 // pred_fallthru
      _
    %405 = vsyncpa [#allocation4], 1
    %406 = vsyncpa [#allocation7], 1
    %407 = vsyncpa [#allocation5], 1

</llo_original>
